<compile_context>
chip_gen: v7x
topology: tpu7x:2x2x1
jax: 0.10.0
libtpu: 0.0.40
codegen_flags: <defaults>
</compile_context>

<pallas_src>
import functools

import jax
import jax.numpy as jnp
import numpy as np
from jax.experimental import pallas as pl
from jax.experimental.pallas import tpu as pltpu


def neural_kernel(head_dim,
                  x_ref, w1_ref, b1_ref, w2_ref, b2_ref,
                  wh_ref, bh_ref, wv2_ref, bv2_ref,
                  wc_ref, bc_ref, out_ref):
    f32 = jnp.float32
    bf16 = jnp.bfloat16

    # shared_representation: Linear(Din,512) -> ReLU -> Linear(512,256)
    x = x_ref[...]                                                       # bf16 (TB, Din)
    h1 = jnp.dot(x, w1_ref[...], preferred_element_type=f32) + b1_ref[...]
    h1 = jnp.maximum(h1, 0.0).astype(bf16)                               # (TB, 512)
    shared = (jnp.dot(h1, w2_ref[...], preferred_element_type=f32)
              + b2_ref[...]).astype(bf16)                                # (TB, 256)

    # Fused first layer of the value head + all NB branch heads: one wide MXU call.
    heads = jnp.dot(shared, wh_ref[...], preferred_element_type=f32) + bh_ref[...]
    heads = jnp.maximum(heads, 0.0)                                      # (TB, H*(NB+1)) f32
    hv = heads[:, :head_dim]                                             # (TB, H)    value head
    hb = heads[:, head_dim:].astype(bf16)                                # (TB, NB*H) branch heads

    # state_value second layer (output width 1): VPU multiply + lane reduce (no MXU).
    state = jnp.sum(hv * wv2_ref[...], axis=-1, keepdims=True) + bv2_ref[...]   # (TB, 1)

    # Fused branch second layers.  wc is block-diagonal AND pre-composed with
    # (I - mean-over-branches), so this matmul directly yields (Adv - Mean),
    # already padded to a lane-dense 128-wide slab.
    adv_minus_mean = jnp.dot(hb, wc_ref[...], preferred_element_type=f32) + bc_ref[...]

    # Single unmasked lane-dense store: (Advantages - Mean) + State.
    out_ref[...] = adv_minus_mean + state


@functools.partial(jax.jit, static_argnums=(2,))
def neural_forward(x, params, num_branches):
    B, d_in = x.shape
    NB = num_branches
    H = params["wv1"].shape[-1]              # 128 (head hidden width)
    A = params["wb2"].shape[-1]              # per-branch output dim
    out_w = NB * A
    out_pad = max(128, ((out_w + 127) // 128) * 128)
    f32, bf16 = jnp.float32, jnp.bfloat16

    # ---- parameter packing (layout + linear-algebra folding, done once) ----
    # Fused head first layer: [wv1 | wb1_0 | ... | wb1_{NB-1}]  -> (256, H*(NB+1))
    wh = jnp.concatenate([params["wv1"]] + [params["wb1"][n] for n in range(NB)], axis=-1)
    bh = jnp.concatenate([params["bv1"]] + [params["bb1"][n] for n in range(NB)], axis=-1)

    # Block-diagonal branch second layer, zero-padded to a 128-lane multiple.
    wblk = jnp.zeros((NB * H, out_pad), f32)
    bblk = jnp.zeros((1, out_pad), f32)
    for n in range(NB):
        wblk = wblk.at[n * H:(n + 1) * H, n * A:(n + 1) * A].set(params["wb2"][n])
        bblk = bblk.at[:, n * A:(n + 1) * A].set(params["bb2"][n])

    # Fold "subtract branch-mean" into the fused weights:  adv @ (I - M) == adv - mean,
    # where M[n*A+a, m*A+a] = 1/NB (computed in f32 outside the kernel).
    m_blk = jnp.tile(jnp.eye(A, dtype=f32) / NB, (NB, NB))               # (NB*A, NB*A)
    t = jnp.eye(out_pad, dtype=f32).at[:out_w, :out_w].add(-m_blk)
    wc = wblk @ t                                                        # (NB*H, out_pad)
    bc = bblk @ t                                                        # (1, out_pad)

    wv2_vec = params["wv2"].T                                            # (1, H)

    # ---- batch tiling (pad batch so tiles satisfy the (8,128) rule) ----
    if B <= 256:
        TB = max(8, ((B + 7) // 8) * 8)      # single tile, sublane-aligned
    else:
        TB = 256
    B_pad = ((B + TB - 1) // TB) * TB
    xb = x.astype(bf16)
    if B_pad != B:
        xb = jnp.pad(xb, ((0, B_pad - B), (0, 0)))
    grid = (B_pad // TB,)

    def full_spec(a):
        zeros = (0,) * a.ndim
        return pl.BlockSpec(a.shape, lambda i, z=zeros: z)

    args = (xb,
            params["w1"].astype(bf16), params["b1"],
            params["w2"].astype(bf16), params["b2"],
            wh.astype(bf16), bh,
            wv2_vec, params["bv2"],
            wc.astype(bf16), bc)
    in_specs = ([pl.BlockSpec((TB, d_in), lambda i: (i, 0))]
                + [full_spec(a) for a in args[1:]])

    slab = pl.pallas_call(
        functools.partial(neural_kernel, H),
        out_shape=jax.ShapeDtypeStruct((B_pad, out_pad), f32),
        grid=grid,
        in_specs=in_specs,
        out_specs=pl.BlockSpec((TB, out_pad), lambda i: (i, 0)),
        compiler_params=pltpu.CompilerParams(
            dimension_semantics=("parallel",)),
    )(*args)

    # slab[b, n*A + a] == (Advantages - Mean + State)[n, b, a].
    # torch .rot90(1, [0, 1]) on the (NB, B, A) tensor == transpose(branch, batch)
    # followed by a flip along the new leading (batch) axis: pure layout plumbing.
    return slab[:B, :out_w].reshape(B, NB, A)[::-1]


def neural_ref(x, params, num_branches):
    """Pure-JAX f32 reference mirroring the PyTorch forward."""
    lin = lambda a, w, b: jnp.dot(a, w) + b
    h = jax.nn.relu(lin(x, params["w1"], params["b1"]))
    shared = lin(h, params["w2"], params["b2"])
    hv = jax.nn.relu(lin(shared, params["wv1"], params["bv1"]))
    state = lin(hv, params["wv2"], params["bv2"])
    advs = jnp.stack([
        lin(jax.nn.relu(lin(shared, params["wb1"][n], params["bb1"][n])),
            params["wb2"][n], params["bb2"][n])
        for n in range(num_branches)
    ], axis=0)
    mean = jnp.mean(advs, axis=0)
    out = advs - mean + state[None]
    return jnp.rot90(out, 1, axes=(0, 1))


def init_params(key, input_dim, num_branches, out_dim):
    """Deterministic PyTorch-Linear-style init (uniform +/- 1/sqrt(fan_in))."""
    keys = iter(jax.random.split(key, 32))

    def lin(fan_in, fan_out, lead=()):
        lim = 1.0 / float(np.sqrt(fan_in))
        w = jax.random.uniform(next(keys), lead + (fan_in, fan_out),
                               jnp.float32, -lim, lim)
        b = jax.random.uniform(next(keys), lead + (1, fan_out),
                               jnp.float32, -lim, lim)
        return w, b

    w1, b1 = lin(input_dim, 512)
    w2, b2 = lin(512, 256)
    wv1, bv1 = lin(256, 128)
    wv2, bv2 = lin(128, 1)
    wb1, bb1 = lin(256, 128, lead=(num_branches,))
    wb2, bb2 = lin(128, out_dim, lead=(num_branches,))
    return dict(w1=w1, b1=b1, w2=w2, b2=b2,
                wv1=wv1, bv1=bv1, wv2=wv2, bv2=bv2,
                wb1=wb1, bb1=bb1, wb2=wb2, bb2=bb2)


if __name__ == "__main__":
    B, INPUT_DIM, NUM_BRANCHES, OUT_DIM = 8, 32, 3, 16
    # NOTE: torch.stack in the reference module requires all outputs_dim equal.
    key = jax.random.PRNGKey(0)
    kx, kp = jax.random.split(key)
    x = jax.random.normal(kx, (B, INPUT_DIM), jnp.float32)
    params = init_params(kp, INPUT_DIM, NUM_BRANCHES, OUT_DIM)

    out = neural_forward(x, params, NUM_BRANCHES)
    out = jax.block_until_ready(out)

    ref = neural_ref(x, params, NUM_BRANCHES)
    assert out.shape == (B, NUM_BRANCHES, OUT_DIM), out.shape
    np.testing.assert_allclose(np.asarray(out), np.asarray(ref),
                               rtol=5e-2, atol=5e-2)
    print("KERNEL_OK")
</pallas_src>

<mosaic_0001>
module attributes {stable_mosaic.version = 11 : i64} {
  func.func @neural_kernel(%arg0: i32, %arg1: memref<8x32xbf16, #tpu.memory_space<vmem>>, %arg2: memref<32x512xbf16, #tpu.memory_space<vmem>>, %arg3: memref<1x512xf32, #tpu.memory_space<vmem>>, %arg4: memref<512x256xbf16, #tpu.memory_space<vmem>>, %arg5: memref<1x256xf32, #tpu.memory_space<vmem>>, %arg6: memref<256x512xbf16, #tpu.memory_space<vmem>>, %arg7: memref<1x512xf32, #tpu.memory_space<vmem>>, %arg8: memref<1x128xf32, #tpu.memory_space<vmem>>, %arg9: memref<1x1xf32, #tpu.memory_space<vmem>>, %arg10: memref<384x128xbf16, #tpu.memory_space<vmem>>, %arg11: memref<1x128xf32, #tpu.memory_space<vmem>>, %arg12: memref<8x128xf32, #tpu.memory_space<vmem>>) attributes {dimension_semantics = [#tpu.dimension_semantics<parallel>], iteration_bounds = array<i64: 1>, scalar_prefetch = 0 : i64, scratch_operands = 0 : i64, tpu.core_type = #tpu.core_type<tc>, window_params = [{transform_indices = @transform_0, window_bounds = array<i64: 8, 32>}, {pipeline_mode = #tpu.pipeline_mode<synchronous>, transform_indices = @transform_1, window_bounds = array<i64: 32, 512>}, {pipeline_mode = #tpu.pipeline_mode<synchronous>, transform_indices = @transform_2, window_bounds = array<i64: 1, 512>}, {pipeline_mode = #tpu.pipeline_mode<synchronous>, transform_indices = @transform_3, window_bounds = array<i64: 512, 256>}, {pipeline_mode = #tpu.pipeline_mode<synchronous>, transform_indices = @transform_4, window_bounds = array<i64: 1, 256>}, {pipeline_mode = #tpu.pipeline_mode<synchronous>, transform_indices = @transform_5, window_bounds = array<i64: 256, 512>}, {pipeline_mode = #tpu.pipeline_mode<synchronous>, transform_indices = @transform_6, window_bounds = array<i64: 1, 512>}, {pipeline_mode = #tpu.pipeline_mode<synchronous>, transform_indices = @transform_7, window_bounds = array<i64: 1, 128>}, {pipeline_mode = #tpu.pipeline_mode<synchronous>, transform_indices = @transform_8, window_bounds = array<i64: 1, 1>}, {pipeline_mode = #tpu.pipeline_mode<synchronous>, transform_indices = @transform_9, window_bounds = array<i64: 384, 128>}, {pipeline_mode = #tpu.pipeline_mode<synchronous>, transform_indices = @transform_10, window_bounds = array<i64: 1, 128>}, {transform_indices = @transform_11, window_bounds = array<i64: 8, 128>}]} {
    %c0 = arith.constant 0 : index
    %c0_0 = arith.constant 0 : index
    %0 = vector.load %arg1[%c0, %c0_0] : memref<8x32xbf16, #tpu.memory_space<vmem>>, vector<8x32xbf16>
    %c0_1 = arith.constant 0 : index
    %c0_2 = arith.constant 0 : index
    %1 = vector.load %arg2[%c0_1, %c0_2] : memref<32x512xbf16, #tpu.memory_space<vmem>>, vector<32x512xbf16>
    %cst = arith.constant dense<0.000000e+00> : vector<8x512xf32>
    %2 = tpu.matmul %0, %1, %cst {dimension_numbers = #tpu.dot_dimension_numbers<[1], [0], [0], [1], [0, 0, 1, 1], [], []>} : vector<8x32xbf16>, vector<32x512xbf16>, vector<8x512xf32> -> vector<8x512xf32>
    %c0_3 = arith.constant 0 : index
    %c0_4 = arith.constant 0 : index
    %3 = vector.load %arg3[%c0_3, %c0_4] : memref<1x512xf32, #tpu.memory_space<vmem>>, vector<1x512xf32>
    %4 = vector.broadcast %3 : vector<1x512xf32> to vector<8x512xf32>
    %5 = arith.addf %2, %4 : vector<8x512xf32>
    %cst_5 = arith.constant 0.000000e+00 : f32
    %6 = vector.broadcast %cst_5 : f32 to vector<8x512xf32>
    %7 = arith.maximumf %5, %6 : vector<8x512xf32>
    %8 = arith.truncf %7 : vector<8x512xf32> to vector<8x512xbf16>
    %c0_6 = arith.constant 0 : index
    %c0_7 = arith.constant 0 : index
    %9 = vector.load %arg4[%c0_6, %c0_7] : memref<512x256xbf16, #tpu.memory_space<vmem>>, vector<512x256xbf16>
    %cst_8 = arith.constant dense<0.000000e+00> : vector<8x256xf32>
    %10 = tpu.matmul %8, %9, %cst_8 {dimension_numbers = #tpu.dot_dimension_numbers<[1], [0], [0], [1], [0, 0, 1, 1], [], []>} : vector<8x512xbf16>, vector<512x256xbf16>, vector<8x256xf32> -> vector<8x256xf32>
    %c0_9 = arith.constant 0 : index
    %c0_10 = arith.constant 0 : index
    %11 = vector.load %arg5[%c0_9, %c0_10] : memref<1x256xf32, #tpu.memory_space<vmem>>, vector<1x256xf32>
    %12 = vector.broadcast %11 : vector<1x256xf32> to vector<8x256xf32>
    %13 = arith.addf %10, %12 : vector<8x256xf32>
    %14 = arith.truncf %13 : vector<8x256xf32> to vector<8x256xbf16>
    %c0_11 = arith.constant 0 : index
    %c0_12 = arith.constant 0 : index
    %15 = vector.load %arg6[%c0_11, %c0_12] : memref<256x512xbf16, #tpu.memory_space<vmem>>, vector<256x512xbf16>
    %cst_13 = arith.constant dense<0.000000e+00> : vector<8x512xf32>
    %16 = tpu.matmul %14, %15, %cst_13 {dimension_numbers = #tpu.dot_dimension_numbers<[1], [0], [0], [1], [0, 0, 1, 1], [], []>} : vector<8x256xbf16>, vector<256x512xbf16>, vector<8x512xf32> -> vector<8x512xf32>
    %c0_14 = arith.constant 0 : index
    %c0_15 = arith.constant 0 : index
    %17 = vector.load %arg7[%c0_14, %c0_15] : memref<1x512xf32, #tpu.memory_space<vmem>>, vector<1x512xf32>
    %18 = vector.broadcast %17 : vector<1x512xf32> to vector<8x512xf32>
    %19 = arith.addf %16, %18 : vector<8x512xf32>
    %cst_16 = arith.constant 0.000000e+00 : f32
    %20 = vector.broadcast %cst_16 : f32 to vector<8x512xf32>
    %21 = arith.maximumf %19, %20 : vector<8x512xf32>
    %22 = vector.extract_strided_slice %21 {offsets = [0, 0], sizes = [8, 128], strides = [1, 1]} : vector<8x512xf32> to vector<8x128xf32>
    %23 = vector.extract_strided_slice %21 {offsets = [0, 128], sizes = [8, 384], strides = [1, 1]} : vector<8x512xf32> to vector<8x384xf32>
    %24 = arith.truncf %23 : vector<8x384xf32> to vector<8x384xbf16>
    %c0_17 = arith.constant 0 : index
    %c0_18 = arith.constant 0 : index
    %25 = vector.load %arg8[%c0_17, %c0_18] : memref<1x128xf32, #tpu.memory_space<vmem>>, vector<1x128xf32>
    %26 = vector.broadcast %25 : vector<1x128xf32> to vector<8x128xf32>
    %27 = arith.mulf %22, %26 : vector<8x128xf32>
    %cst_19 = arith.constant dense<0.000000e+00> : vector<8xf32>
    %28 = vector.multi_reduction <add>, %27, %cst_19 [1] : vector<8x128xf32> to vector<8xf32>
    %29 = vector.shape_cast %28 : vector<8xf32> to vector<8x1xf32>
    %c0_20 = arith.constant 0 : index
    %c0_21 = arith.constant 0 : index
    %30 = vector.load %arg9[%c0_20, %c0_21] : memref<1x1xf32, #tpu.memory_space<vmem>>, vector<1x1xf32>
    %31 = vector.broadcast %30 : vector<1x1xf32> to vector<8x1xf32>
    %32 = arith.addf %29, %31 : vector<8x1xf32>
    %c0_22 = arith.constant 0 : index
    %c0_23 = arith.constant 0 : index
    %33 = vector.load %arg10[%c0_22, %c0_23] : memref<384x128xbf16, #tpu.memory_space<vmem>>, vector<384x128xbf16>
    %cst_24 = arith.constant dense<0.000000e+00> : vector<8x128xf32>
    %34 = tpu.matmul %24, %33, %cst_24 {dimension_numbers = #tpu.dot_dimension_numbers<[1], [0], [0], [1], [0, 0, 1, 1], [], []>} : vector<8x384xbf16>, vector<384x128xbf16>, vector<8x128xf32> -> vector<8x128xf32>
    %c0_25 = arith.constant 0 : index
    %c0_26 = arith.constant 0 : index
    %35 = vector.load %arg11[%c0_25, %c0_26] : memref<1x128xf32, #tpu.memory_space<vmem>>, vector<1x128xf32>
    %36 = vector.broadcast %35 : vector<1x128xf32> to vector<8x128xf32>
    %37 = arith.addf %34, %36 : vector<8x128xf32>
    %38 = vector.broadcast %32 : vector<8x1xf32> to vector<8x128xf32>
    %39 = arith.addf %37, %38 : vector<8x128xf32>
    %c0_27 = arith.constant 0 : index
    %c0_28 = arith.constant 0 : index
    %40 = vector.load %arg12[%c0_27, %c0_28] : memref<8x128xf32, #tpu.memory_space<vmem>>, vector<8x128xf32>
    tpu.vector_store %arg12[%c0_27, %c0_28], %39 {strides = array<i32>} : memref<8x128xf32, #tpu.memory_space<vmem>>, vector<8x128xf32>,
    return
  }
  func.func @transform_0(%arg0: i32) -> (i32, i32) {
    %c0_i32 = arith.constant 0 : i32
    %c0_i32_0 = arith.constant 0 : i32
    return %arg0, %c0_i32 : i32, i32
  }
  func.func @transform_1(%arg0: i32) -> (i32, i32) {
    %c0_i32 = arith.constant 0 : i32
    %c0_i32_0 = arith.constant 0 : i32
    %c0_i32_1 = arith.constant 0 : i32
    return %c0_i32, %c0_i32_0 : i32, i32
  }
  func.func @transform_2(%arg0: i32) -> (i32, i32) {
    %c0_i32 = arith.constant 0 : i32
    %c0_i32_0 = arith.constant 0 : i32
    %c0_i32_1 = arith.constant 0 : i32
    return %c0_i32, %c0_i32_0 : i32, i32
  }
  func.func @transform_3(%arg0: i32) -> (i32, i32) {
    %c0_i32 = arith.constant 0 : i32
    %c0_i32_0 = arith.constant 0 : i32
    %c0_i32_1 = arith.constant 0 : i32
    return %c0_i32, %c0_i32_0 : i32, i32
  }
  func.func @transform_4(%arg0: i32) -> (i32, i32) {
    %c0_i32 = arith.constant 0 : i32
    %c0_i32_0 = arith.constant 0 : i32
    %c0_i32_1 = arith.constant 0 : i32
    return %c0_i32, %c0_i32_0 : i32, i32
  }
  func.func @transform_5(%arg0: i32) -> (i32, i32) {
    %c0_i32 = arith.constant 0 : i32
    %c0_i32_0 = arith.constant 0 : i32
    %c0_i32_1 = arith.constant 0 : i32
    return %c0_i32, %c0_i32_0 : i32, i32
  }
  func.func @transform_6(%arg0: i32) -> (i32, i32) {
    %c0_i32 = arith.constant 0 : i32
    %c0_i32_0 = arith.constant 0 : i32
    %c0_i32_1 = arith.constant 0 : i32
    return %c0_i32, %c0_i32_0 : i32, i32
  }
  func.func @transform_7(%arg0: i32) -> (i32, i32) {
    %c0_i32 = arith.constant 0 : i32
    %c0_i32_0 = arith.constant 0 : i32
    %c0_i32_1 = arith.constant 0 : i32
    return %c0_i32, %c0_i32_0 : i32, i32
  }
  func.func @transform_8(%arg0: i32) -> (i32, i32) {
    %c0_i32 = arith.constant 0 : i32
    %c0_i32_0 = arith.constant 0 : i32
    %c0_i32_1 = arith.constant 0 : i32
    return %c0_i32, %c0_i32_0 : i32, i32
  }
  func.func @transform_9(%arg0: i32) -> (i32, i32) {
    %c0_i32 = arith.constant 0 : i32
    %c0_i32_0 = arith.constant 0 : i32
    %c0_i32_1 = arith.constant 0 : i32
    return %c0_i32, %c0_i32_0 : i32, i32
  }
  func.func @transform_10(%arg0: i32) -> (i32, i32) {
    %c0_i32 = arith.constant 0 : i32
    %c0_i32_0 = arith.constant 0 : i32
    %c0_i32_1 = arith.constant 0 : i32
    return %c0_i32, %c0_i32_0 : i32, i32
  }
  func.func @transform_11(%arg0: i32) -> (i32, i32) {
    %c0_i32 = arith.constant 0 : i32
    %c0_i32_0 = arith.constant 0 : i32
    return %arg0, %c0_i32 : i32, i32
  }
}

</mosaic_0001>

<llo_original>
// kernel: neural_forward.1
$region0: #{neural_forward.1}
  #allocation0 [shape = 'u32[]', space=smem, size = 0x4, offset = 0x4, fixed_abs, tag = 'smem constant byte address 0x4 - core index']
  #allocation1 [shape = 'u32[144,128]{1,0:T(1,128)}', space=vmem, size = 0x12000, scoped, tag = 'internal scratch']
  #allocation2 [shape = 'f32[1,1]{1,0:T(1,128)S(1)}', space=vmem, size = 0x200, scoped, tag = 'scoped memory for neural_forward.1']
  %s0 = inlined_call_operand.vmem [shape: bf16[8,32], index: 0, kind: input, shape index: {}]
  %s1 = inlined_call_operand.vmem [shape: bf16[32,512], index: 1, kind: input, shape index: {}]
  %s2 = inlined_call_operand.vmem [shape: f32[1,512], index: 2, kind: input, shape index: {}]
  %s3 = inlined_call_operand.vmem [shape: bf16[512,256], index: 3, kind: input, shape index: {}]
  %s4 = inlined_call_operand.vmem [shape: f32[1,256], index: 4, kind: input, shape index: {}]
  %s5 = inlined_call_operand.vmem [shape: bf16[256,512], index: 5, kind: input, shape index: {}]
  %s6 = inlined_call_operand.vmem [shape: f32[1,512], index: 6, kind: input, shape index: {}]
  %s7 = inlined_call_operand.vmem [shape: f32[1,128], index: 7, kind: input, shape index: {}]
  %s8 = inlined_call_operand.<no memory space> [shape: f32[1,1], index: 8, kind: input, shape index: {}]
  %s9 = inlined_call_operand.vmem [shape: bf16[384,128], index: 9, kind: input, shape index: {}]
  %s10 = inlined_call_operand.vmem [shape: f32[1,128], index: 10, kind: input, shape index: {}]
  %s11 = inlined_call_operand.vmem [shape: f32[8,128], index: 11, kind: output, shape index: {}]
  %s12 = sld [smem:[#allocation0]]
  $region54: #{neural_forward.1} parent=0
    _
  %s14 = ssub.s32 1, %s12
  %s15 = scalar_select 0, %s14, %s12
  %v16 = vstv %s8
  %17 = vst [vmem:[#allocation2] sm:$0x1] %v16
  // Predicated region
  $region2: #{neural_forward.1} parent=0 // pred_check
    _
  $region3: #{neural_forward.1} parent=0 // pred_check_branch
    %19 = sbr.rel (0) target = $region5
  $region4: #{neural_forward.1} parent=0 // pred_region
    _
  $region5: #{neural_forward.1} parent=0 // pred_fallthru
    _
  // Predicated region
  $region6: #{neural_forward.1} parent=0 // pred_check
    _
  $region7: #{neural_forward.1} parent=0 // pred_check_branch
    %21 = sbr.rel (0) target = $region9
  $region8: #{neural_forward.1} parent=0 // pred_region
    _
  $region9: #{neural_forward.1} parent=0 // pred_fallthru
    _
  // Predicated region
  $region10: #{neural_forward.1} parent=0 // pred_check
    _
  $region11: #{neural_forward.1} parent=0 // pred_check_branch
    %23 = sbr.rel (0) target = $region13
  $region12: #{neural_forward.1} parent=0 // pred_region
    _
  $region13: #{neural_forward.1} parent=0 // pred_fallthru
    _
  // Predicated region
  $region14: #{neural_forward.1} parent=0 // pred_check
    _
  $region15: #{neural_forward.1} parent=0 // pred_check_branch
    %25 = sbr.rel (0) target = $region17
  $region16: #{neural_forward.1} parent=0 // pred_region
    _
  $region17: #{neural_forward.1} parent=0 // pred_fallthru
    _
  // Predicated region
  $region18: #{neural_forward.1} parent=0 // pred_check
    _
  $region19: #{neural_forward.1} parent=0 // pred_check_branch
    %27 = sbr.rel (0) target = $region21
  $region20: #{neural_forward.1} parent=0 // pred_region
    _
  $region21: #{neural_forward.1} parent=0 // pred_fallthru
    _
  // Predicated region
  $region22: #{neural_forward.1} parent=0 // pred_check
    _
  $region23: #{neural_forward.1} parent=0 // pred_check_branch
    %29 = sbr.rel (0) target = $region25
  $region24: #{neural_forward.1} parent=0 // pred_region
    _
  $region25: #{neural_forward.1} parent=0 // pred_fallthru
    _
  // Predicated region
  $region26: #{neural_forward.1} parent=0 // pred_check
    _
  $region27: #{neural_forward.1} parent=0 // pred_check_branch
    %31 = sbr.rel (0) target = $region29
  $region28: #{neural_forward.1} parent=0 // pred_region
    _
  $region29: #{neural_forward.1} parent=0 // pred_fallthru
    _
  // Predicated region
  $region30: #{neural_forward.1} parent=0 // pred_check
    _
  $region31: #{neural_forward.1} parent=0 // pred_check_branch
    %33 = sbr.rel (0) target = $region33
  $region32: #{neural_forward.1} parent=0 // pred_region
    _
  $region33: #{neural_forward.1} parent=0 // pred_fallthru
    _
  // Predicated region
  $region34: #{neural_forward.1} parent=0 // pred_check
    _
  $region35: #{neural_forward.1} parent=0 // pred_check_branch
    %35 = sbr.rel (0) target = $region37
  $region36: #{neural_forward.1} parent=0 // pred_region
    _
  $region37: #{neural_forward.1} parent=0 // pred_fallthru
    _
  // Predicated region
  $region38: #{neural_forward.1} parent=0 // pred_check
    _
  $region39: #{neural_forward.1} parent=0 // pred_check_branch
    %37 = sbr.rel (0) target = $region41
  $region40: #{neural_forward.1} parent=0 // pred_region
    _
  $region41: #{neural_forward.1} parent=0 // pred_fallthru
    _
  // Predicated region
  $region42: #{neural_forward.1} parent=0 // pred_check
    _
  $region43: #{neural_forward.1} parent=0 // pred_check_branch
    %39 = sbr.rel (0) target = $region45
  $region44: #{neural_forward.1} parent=0 // pred_region
    _
  $region45: #{neural_forward.1} parent=0 // pred_fallthru
    _
  %v41 = vld [vmem:[%s0] sm:$0xf]
  %v42 = vld [vmem:[%s1] sm:$0xff]
  %v43 = vld [vmem:[%s1 + $0x8] sm:$0xff]
  %v44 = vld [vmem:[%s1 + $0x10] sm:$0xff]
  %v45 = vld [vmem:[%s1 + $0x18] sm:$0xff]
  %v46 = vld [vmem:[%s1 + $0x20] sm:$0xff]
  %v47 = vld [vmem:[%s1 + $0x28] sm:$0xff]
  %v48 = vld [vmem:[%s1 + $0x30] sm:$0xff]
  %v49 = vld [vmem:[%s1 + $0x38] sm:$0xff]
  %v50 = vld [vmem:[%s2] sm:$0xf]
  %v52 = vlaneseq
  %v53 = vshrl.u32 %v52, 7
  %v54 = vsub.s32 0, %v53
  %v55 = vrot.slane %v50, %v54
  %v56 = vlaneseq
  %v57 = vshrl.u32 %v56, 7
  %v58 = vsub.s32 1, %v57
  %v59 = vrot.slane %v50, %v58
  %v60 = vlaneseq
  %v61 = vshrl.u32 %v60, 7
  %v62 = vsub.s32 2, %v61
  %v63 = vrot.slane %v50, %v62
  %v64 = vlaneseq
  %v65 = vshrl.u32 %v64, 7
  %v66 = vsub.s32 3, %v65
  %v67 = vrot.slane %v50, %v66
  %v80 = vunpack.c.l.b16 %v42
  %v81 = vunpack.c.h.b16 %v42
  %v82 = vunpack.c.l.b16 %v43
  %v83 = vunpack.c.h.b16 %v43
  %v84 = vunpack.c.l.b16 %v44
  %v85 = vunpack.c.h.b16 %v44
  %v86 = vunpack.c.l.b16 %v45
  %v87 = vunpack.c.h.b16 %v45
  %v88 = vunpack.c.l.b16 %v46
  %v89 = vunpack.c.h.b16 %v46
  %v90 = vunpack.c.l.b16 %v47
  %v91 = vunpack.c.h.b16 %v47
  %v92 = vunpack.c.l.b16 %v48
  %v93 = vunpack.c.h.b16 %v48
  %v94 = vunpack.c.l.b16 %v49
  %v95 = vunpack.c.h.b16 %v49
  %v96 = vpack.c.b16 %v84, %v80
  %v97 = vpack.c.b16 %v85, %v81
  %v98 = vpack.c.b16 %v86, %v82
  %v99 = vpack.c.b16 %v87, %v83
  %v100 = vpack.c.b16 %v92, %v88
  %v101 = vpack.c.b16 %v93, %v89
  %v102 = vpack.c.b16 %v94, %v90
  %v103 = vpack.c.b16 %v95, %v91
  %vm112 = vcmask 261120
  %v114 = vsel %vm112, %v41, 0
  %116 = vmatprep.subr.bf16.mxu0 %v97
  %117 = vmatpush1.bf16.msra.mxu0 %v96
  %118 = vmatprep.subr.bf16.mxu0 %v101
  %119 = vmatpush1.bf16.msra.mxu0 %v100
  %120 = vmatprep.subr.bf16.mxu0 0
  %121 = vmatpush1.bf16.msra.mxu0 0
  %122 = vmatprep.subr.bf16.mxu0 0
  %123 = vmatpush1.bf16.msra.mxu0 0
  %124 = vmatprep.subr.bf16.mxu0 0
  %125 = vmatpush1.bf16.msra.mxu0 0
  %126 = vmatprep.subr.bf16.mxu0 0
  %127 = vmatpush1.bf16.msra.mxu0 0
  %128 = vmatprep.subr.bf16.mxu0 0
  %129 = vmatpush1.bf16.msra.mxu0 0
  %130 = vmatprep.subr.bf16.mxu0 0
  %131 = vmatpush1.bf16.msra.mxu0 0
  %132 = vmatprep.subr.bf16.mxu0 0
  %133 = vmatpush1.bf16.msra.mxu0 0
  %134 = vmatprep.subr.bf16.mxu0 0
  %135 = vmatpush1.bf16.msra.mxu0 0
  %136 = vmatprep.subr.bf16.mxu0 0
  %137 = vmatpush1.bf16.msra.mxu0 0
  %138 = vmatprep.subr.bf16.mxu0 0
  %139 = vmatpush1.bf16.msra.mxu0 0
  %140 = vmatprep.subr.bf16.mxu0 0
  %141 = vmatpush1.bf16.msra.mxu0 0
  %142 = vmatprep.subr.bf16.mxu0 0
  %143 = vmatpush1.bf16.msra.mxu0 0
  %144 = vmatprep.subr.bf16.mxu0 0
  %145 = vmatpush1.bf16.msra.mxu0 0
  %146 = vmatprep.subr.bf16.mxu0 0
  %147 = vmatpush1.bf16.msra.mxu0 0
  %148 = vmatprep.mubr.bf16.mxu0 0
  %149 = vmatmul.mubr.bf16.gmra.mrb[0].mxu0 %v114
  %v150 = vpop.f32.mrb[0].mxu0
  %v151 = vadd.f32 %v55, %v150
  %v152 = vpop.f32.mrb[0].mxu0
  %v153 = vadd.f32 %v59, %v152
  %v154 = vpop.f32.mrb[0].mxu0
  %v155 = vpop.f32.mrb[0].mxu0
  %156 = vdwg.mxu0
  %157 = vmatprep.subr.bf16.mxu0 %v99
  %158 = vmatpush1.bf16.msra.mxu0 %v98
  %159 = vmatprep.subr.bf16.mxu0 %v103
  %160 = vmatpush1.bf16.msra.mxu0 %v102
  %161 = vmatprep.subr.bf16.mxu0 0
  %162 = vmatpush1.bf16.msra.mxu0 0
  %163 = vmatprep.subr.bf16.mxu0 0
  %164 = vmatpush1.bf16.msra.mxu0 0
  %165 = vmatprep.subr.bf16.mxu0 0
  %166 = vmatpush1.bf16.msra.mxu0 0
  %167 = vmatprep.subr.bf16.mxu0 0
  %168 = vmatpush1.bf16.msra.mxu0 0
  %169 = vmatprep.subr.bf16.mxu0 0
  %170 = vmatpush1.bf16.msra.mxu0 0
  %171 = vmatprep.subr.bf16.mxu0 0
  %172 = vmatpush1.bf16.msra.mxu0 0
  %173 = vmatprep.subr.bf16.mxu0 0
  %174 = vmatpush1.bf16.msra.mxu0 0
  %175 = vmatprep.subr.bf16.mxu0 0
  %176 = vmatpush1.bf16.msra.mxu0 0
  %177 = vmatprep.subr.bf16.mxu0 0
  %178 = vmatpush1.bf16.msra.mxu0 0
  %179 = vmatprep.subr.bf16.mxu0 0
  %180 = vmatpush1.bf16.msra.mxu0 0
  %181 = vmatprep.subr.bf16.mxu0 0
  %182 = vmatpush1.bf16.msra.mxu0 0
  %183 = vmatprep.subr.bf16.mxu0 0
  %184 = vmatpush1.bf16.msra.mxu0 0
  %185 = vmatprep.subr.bf16.mxu0 0
  %186 = vmatpush1.bf16.msra.mxu0 0
  %187 = vmatprep.subr.bf16.mxu0 0
  %188 = vmatpush1.bf16.msra.mxu0 0
  %189 = vmatprep.mubr.bf16.mxu0 0
  %190 = vmatmul.mubr.bf16.gmra.mrb[0].mxu0 %v114
  %v191 = vpop.f32.mrb[0].mxu0
  %v192 = vadd.f32 %v63, %v191
  %v193 = vpop.f32.mrb[0].mxu0
  %v194 = vadd.f32 %v67, %v193
  %v195 = vpop.f32.mrb[0].mxu0
  %v196 = vpop.f32.mrb[0].mxu0
  %197 = vdwg.mxu0
  %v198 = vmax.f32 %v151, 0.0
  %v199 = vmax.f32 %v153, 0.0
  %v200 = vmax.f32 %v192, 0.0
  %v201 = vmax.f32 %v194, 0.0
  %v202 = vpack.c.bf16 %v198, %v198
  %v203 = vpack.c.bf16 %v199, %v199
  %v204 = vpack.c.bf16 %v200, %v200
  %v205 = vpack.c.bf16 %v201, %v201
  %v206 = vld [vmem:[%s3] sm:$0xff]
  %v207 = vld [vmem:[%s3 + $0x8] sm:$0xff]
  %v208 = vld [vmem:[%s3 + $0x10] sm:$0xff]
  %v209 = vld [vmem:[%s3 + $0x18] sm:$0xff]
  %v210 = vld [vmem:[%s3 + $0x20] sm:$0xff]
  %v211 = vld [vmem:[%s3 + $0x28] sm:$0xff]
  %v212 = vld [vmem:[%s3 + $0x30] sm:$0xff]
  %v213 = vld [vmem:[%s3 + $0x38] sm:$0xff]
  %v214 = vld [vmem:[%s3 + $0x40] sm:$0xff]
  %v215 = vld [vmem:[%s3 + $0x48] sm:$0xff]
  %v216 = vld [vmem:[%s3 + $0x50] sm:$0xff]
  %v217 = vld [vmem:[%s3 + $0x58] sm:$0xff]
  %v218 = vld [vmem:[%s3 + $0x60] sm:$0xff]
  %v219 = vld [vmem:[%s3 + $0x68] sm:$0xff]
  %v220 = vld [vmem:[%s3 + $0x70] sm:$0xff]
  %v221 = vld [vmem:[%s3 + $0x78] sm:$0xff]
  %v222 = vld [vmem:[%s3 + $0x80] sm:$0xff]
  %v223 = vld [vmem:[%s3 + $0x88] sm:$0xff]
  %v224 = vld [vmem:[%s3 + $0x90] sm:$0xff]
  %v225 = vld [vmem:[%s3 + $0x98] sm:$0xff]
  %v226 = vld [vmem:[%s3 + $0xa0] sm:$0xff]
  %v227 = vld [vmem:[%s3 + $0xa8] sm:$0xff]
  %v228 = vld [vmem:[%s3 + $0xb0] sm:$0xff]
  %v229 = vld [vmem:[%s3 + $0xb8] sm:$0xff]
  %v230 = vld [vmem:[%s3 + $0xc0] sm:$0xff]
  %v231 = vld [vmem:[%s3 + $0xc8] sm:$0xff]
  %v232 = vld [vmem:[%s3 + $0xd0] sm:$0xff]
  %v233 = vld [vmem:[%s3 + $0xd8] sm:$0xff]
  %v234 = vld [vmem:[%s3 + $0xe0] sm:$0xff]
  %v235 = vld [vmem:[%s3 + $0xe8] sm:$0xff]
  %v236 = vld [vmem:[%s3 + $0xf0] sm:$0xff]
  %v237 = vld [vmem:[%s3 + $0xf8] sm:$0xff]
  %v238 = vld [vmem:[%s3 + $0x100] sm:$0xff]
  %v239 = vld [vmem:[%s3 + $0x108] sm:$0xff]
  %v240 = vld [vmem:[%s3 + $0x110] sm:$0xff]
  %v241 = vld [vmem:[%s3 + $0x118] sm:$0xff]
  %v242 = vld [vmem:[%s3 + $0x120] sm:$0xff]
  %v243 = vld [vmem:[%s3 + $0x128] sm:$0xff]
  %v244 = vld [vmem:[%s3 + $0x130] sm:$0xff]
  %v245 = vld [vmem:[%s3 + $0x138] sm:$0xff]
  %v246 = vld [vmem:[%s3 + $0x140] sm:$0xff]
  %v247 = vld [vmem:[%s3 + $0x148] sm:$0xff]
  %v248 = vld [vmem:[%s3 + $0x150] sm:$0xff]
  %v249 = vld [vmem:[%s3 + $0x158] sm:$0xff]
  %v250 = vld [vmem:[%s3 + $0x160] sm:$0xff]
  %v251 = vld [vmem:[%s3 + $0x168] sm:$0xff]
  %v252 = vld [vmem:[%s3 + $0x170] sm:$0xff]
  %v253 = vld [vmem:[%s3 + $0x178] sm:$0xff]
  %v254 = vld [vmem:[%s3 + $0x180] sm:$0xff]
  %v255 = vld [vmem:[%s3 + $0x188] sm:$0xff]
  %v256 = vld [vmem:[%s3 + $0x190] sm:$0xff]
  %v257 = vld [vmem:[%s3 + $0x198] sm:$0xff]
  %v258 = vld [vmem:[%s3 + $0x1a0] sm:$0xff]
  %v259 = vld [vmem:[%s3 + $0x1a8] sm:$0xff]
  %v260 = vld [vmem:[%s3 + $0x1b0] sm:$0xff]
  %v261 = vld [vmem:[%s3 + $0x1b8] sm:$0xff]
  %v262 = vld [vmem:[%s3 + $0x1c0] sm:$0xff]
  %v263 = vld [vmem:[%s3 + $0x1c8] sm:$0xff]
  %v264 = vld [vmem:[%s3 + $0x1d0] sm:$0xff]
  %v265 = vld [vmem:[%s3 + $0x1d8] sm:$0xff]
  %v266 = vld [vmem:[%s3 + $0x1e0] sm:$0xff]
  %v267 = vld [vmem:[%s3 + $0x1e8] sm:$0xff]
  %v268 = vld [vmem:[%s3 + $0x1f0] sm:$0xff]
  %v269 = vld [vmem:[%s3 + $0x1f8] sm:$0xff]
  %v270 = vld [vmem:[%s4] sm:$0x3]
  %v272 = vlaneseq
  %v273 = vshrl.u32 %v272, 7
  %v274 = vsub.s32 0, %v273
  %v275 = vrot.slane %v270, %v274
  %v276 = vlaneseq
  %v277 = vshrl.u32 %v276, 7
  %v278 = vsub.s32 1, %v277
  %v279 = vrot.slane %v270, %v278
  %v346 = vunpack.c.l.b16 %v206
  %v347 = vunpack.c.h.b16 %v206
  %v348 = vunpack.c.l.b16 %v207
  %v349 = vunpack.c.h.b16 %v207
  %v350 = vunpack.c.l.b16 %v208
  %v351 = vunpack.c.h.b16 %v208
  %v352 = vunpack.c.l.b16 %v209
  %v353 = vunpack.c.h.b16 %v209
  %v354 = vunpack.c.l.b16 %v210
  %v355 = vunpack.c.h.b16 %v210
  %v356 = vunpack.c.l.b16 %v211
  %v357 = vunpack.c.h.b16 %v211
  %v358 = vunpack.c.l.b16 %v212
  %v359 = vunpack.c.h.b16 %v212
  %v360 = vunpack.c.l.b16 %v213
  %v361 = vunpack.c.h.b16 %v213
  %v362 = vunpack.c.l.b16 %v214
  %v363 = vunpack.c.h.b16 %v214
  %v364 = vunpack.c.l.b16 %v215
  %v365 = vunpack.c.h.b16 %v215
  %v366 = vunpack.c.l.b16 %v216
  %v367 = vunpack.c.h.b16 %v216
  %v368 = vunpack.c.l.b16 %v217
  %v369 = vunpack.c.h.b16 %v217
  %v370 = vunpack.c.l.b16 %v218
  %v371 = vunpack.c.h.b16 %v218
  %v372 = vunpack.c.l.b16 %v219
  %v373 = vunpack.c.h.b16 %v219
  %v374 = vunpack.c.l.b16 %v220
  %v375 = vunpack.c.h.b16 %v220
  %v376 = vunpack.c.l.b16 %v221
  %v377 = vunpack.c.h.b16 %v221
  %v378 = vunpack.c.l.b16 %v222
  %v379 = vunpack.c.h.b16 %v222
  %v380 = vunpack.c.l.b16 %v223
  %v381 = vunpack.c.h.b16 %v223
  %v382 = vunpack.c.l.b16 %v224
  %v383 = vunpack.c.h.b16 %v224
  %v384 = vunpack.c.l.b16 %v225
  %v385 = vunpack.c.h.b16 %v225
  %v386 = vunpack.c.l.b16 %v226
  %v387 = vunpack.c.h.b16 %v226
  %v388 = vunpack.c.l.b16 %v227
  %v389 = vunpack.c.h.b16 %v227
  %v390 = vunpack.c.l.b16 %v228
  %v391 = vunpack.c.h.b16 %v228
  %v392 = vunpack.c.l.b16 %v229
  %v393 = vunpack.c.h.b16 %v229
  %v394 = vunpack.c.l.b16 %v230
  %v395 = vunpack.c.h.b16 %v230
  %v396 = vunpack.c.l.b16 %v231
  %v397 = vunpack.c.h.b16 %v231
  %v398 = vunpack.c.l.b16 %v232
  %v399 = vunpack.c.h.b16 %v232
  %v400 = vunpack.c.l.b16 %v233
  %v401 = vunpack.c.h.b16 %v233
  %v402 = vunpack.c.l.b16 %v234
  %v403 = vunpack.c.h.b16 %v234
  %v404 = vunpack.c.l.b16 %v235
  %v405 = vunpack.c.h.b16 %v235
  %v406 = vunpack.c.l.b16 %v236
  %v407 = vunpack.c.h.b16 %v236
  %v408 = vunpack.c.l.b16 %v237
  %v409 = vunpack.c.h.b16 %v237
  %v410 = vunpack.c.l.b16 %v238
  %v411 = vunpack.c.h.b16 %v238
  %v412 = vunpack.c.l.b16 %v239
  %v413 = vunpack.c.h.b16 %v239
  %v414 = vunpack.c.l.b16 %v240
  %v415 = vunpack.c.h.b16 %v240
  %v416 = vunpack.c.l.b16 %v241
  %v417 = vunpack.c.h.b16 %v241
  %v418 = vunpack.c.l.b16 %v242
  %v419 = vunpack.c.h.b16 %v242
  %v420 = vunpack.c.l.b16 %v243
  %v421 = vunpack.c.h.b16 %v243
  %v422 = vunpack.c.l.b16 %v244
  %v423 = vunpack.c.h.b16 %v244
  %v424 = vunpack.c.l.b16 %v245
  %v425 = vunpack.c.h.b16 %v245
  %v426 = vunpack.c.l.b16 %v246
  %v427 = vunpack.c.h.b16 %v246
  %v428 = vunpack.c.l.b16 %v247
  %v429 = vunpack.c.h.b16 %v247
  %v430 = vunpack.c.l.b16 %v248
  %v431 = vunpack.c.h.b16 %v248
  %v432 = vunpack.c.l.b16 %v249
  %v433 = vunpack.c.h.b16 %v249
  %v434 = vunpack.c.l.b16 %v250
  %v435 = vunpack.c.h.b16 %v250
  %v436 = vunpack.c.l.b16 %v251
  %v437 = vunpack.c.h.b16 %v251
  %v438 = vunpack.c.l.b16 %v252
  %v439 = vunpack.c.h.b16 %v252
  %v440 = vunpack.c.l.b16 %v253
  %v441 = vunpack.c.h.b16 %v253
  %v442 = vunpack.c.l.b16 %v254
  %v443 = vunpack.c.h.b16 %v254
  %v444 = vunpack.c.l.b16 %v255
  %v445 = vunpack.c.h.b16 %v255
  %v446 = vunpack.c.l.b16 %v256
  %v447 = vunpack.c.h.b16 %v256
  %v448 = vunpack.c.l.b16 %v257
  %v449 = vunpack.c.h.b16 %v257
  %v450 = vunpack.c.l.b16 %v258
  %v451 = vunpack.c.h.b16 %v258
  %v452 = vunpack.c.l.b16 %v259
  %v453 = vunpack.c.h.b16 %v259
  %v454 = vunpack.c.l.b16 %v260
  %v455 = vunpack.c.h.b16 %v260
  %v456 = vunpack.c.l.b16 %v261
  %v457 = vunpack.c.h.b16 %v261
  %v458 = vunpack.c.l.b16 %v262
  %v459 = vunpack.c.h.b16 %v262
  %v460 = vunpack.c.l.b16 %v263
  %v461 = vunpack.c.h.b16 %v263
  %v462 = vunpack.c.l.b16 %v264
  %v463 = vunpack.c.h.b16 %v264
  %v464 = vunpack.c.l.b16 %v265
  %v465 = vunpack.c.h.b16 %v265
  %v466 = vunpack.c.l.b16 %v266
  %v467 = vunpack.c.h.b16 %v266
  %v468 = vunpack.c.l.b16 %v267
  %v469 = vunpack.c.h.b16 %v267
  %v470 = vunpack.c.l.b16 %v268
  %v471 = vunpack.c.h.b16 %v268
  %v472 = vunpack.c.l.b16 %v269
  %v473 = vunpack.c.h.b16 %v269
  %v474 = vpack.c.b16 %v348, %v346
  %v475 = vpack.c.b16 %v349, %v347
  %v476 = vpack.c.b16 %v352, %v350
  %v477 = vpack.c.b16 %v353, %v351
  %v478 = vpack.c.b16 %v356, %v354
  %v479 = vpack.c.b16 %v357, %v355
  %v480 = vpack.c.b16 %v360, %v358
  %v481 = vpack.c.b16 %v361, %v359
  %v482 = vpack.c.b16 %v364, %v362
  %v483 = vpack.c.b16 %v365, %v363
  %v484 = vpack.c.b16 %v368, %v366
  %v485 = vpack.c.b16 %v369, %v367
  %v486 = vpack.c.b16 %v372, %v370
  %v487 = vpack.c.b16 %v373, %v371
  %v488 = vpack.c.b16 %v376, %v374
  %v489 = vpack.c.b16 %v377, %v375
  %v490 = vpack.c.b16 %v380, %v378
  %v491 = vpack.c.b16 %v381, %v379
  %v492 = vpack.c.b16 %v384, %v382
  %v493 = vpack.c.b16 %v385, %v383
  %v494 = vpack.c.b16 %v388, %v386
  %v495 = vpack.c.b16 %v389, %v387
  %v496 = vpack.c.b16 %v392, %v390
  %v497 = vpack.c.b16 %v393, %v391
  %v498 = vpack.c.b16 %v396, %v394
  %v499 = vpack.c.b16 %v397, %v395
  %v500 = vpack.c.b16 %v400, %v398
  %v501 = vpack.c.b16 %v401, %v399
  %v502 = vpack.c.b16 %v404, %v402
  %v503 = vpack.c.b16 %v405, %v403
  %v504 = vpack.c.b16 %v408, %v406
  %v505 = vpack.c.b16 %v409, %v407
  %v506 = vpack.c.b16 %v412, %v410
  %v507 = vpack.c.b16 %v413, %v411
  %v508 = vpack.c.b16 %v416, %v414
  %v509 = vpack.c.b16 %v417, %v415
  %v510 = vpack.c.b16 %v420, %v418
  %v511 = vpack.c.b16 %v421, %v419
  %v512 = vpack.c.b16 %v424, %v422
  %v513 = vpack.c.b16 %v425, %v423
  %v514 = vpack.c.b16 %v428, %v426
  %v515 = vpack.c.b16 %v429, %v427
  %v516 = vpack.c.b16 %v432, %v430
  %v517 = vpack.c.b16 %v433, %v431
  %v518 = vpack.c.b16 %v436, %v434
  %v519 = vpack.c.b16 %v437, %v435
  %v520 = vpack.c.b16 %v440, %v438
  %v521 = vpack.c.b16 %v441, %v439
  %v522 = vpack.c.b16 %v444, %v442
  %v523 = vpack.c.b16 %v445, %v443
  %v524 = vpack.c.b16 %v448, %v446
  %v525 = vpack.c.b16 %v449, %v447
  %v526 = vpack.c.b16 %v452, %v450
  %v527 = vpack.c.b16 %v453, %v451
  %v528 = vpack.c.b16 %v456, %v454
  %v529 = vpack.c.b16 %v457, %v455
  %v530 = vpack.c.b16 %v460, %v458
  %v531 = vpack.c.b16 %v461, %v459
  %v532 = vpack.c.b16 %v464, %v462
  %v533 = vpack.c.b16 %v465, %v463
  %v534 = vpack.c.b16 %v468, %v466
  %v535 = vpack.c.b16 %v469, %v467
  %v536 = vpack.c.b16 %v472, %v470
  %v537 = vpack.c.b16 %v473, %v471
  %602 = vmatprep.subr.bf16.mxu0 %v475
  %603 = vmatpush1.bf16.msra.mxu0 %v474
  %604 = vmatprep.subr.bf16.mxu0 %v477
  %605 = vmatpush1.bf16.msra.mxu0 %v476
  %606 = vmatprep.subr.bf16.mxu0 %v479
  %607 = vmatpush1.bf16.msra.mxu0 %v478
  %608 = vmatprep.subr.bf16.mxu0 %v481
  %609 = vmatpush1.bf16.msra.mxu0 %v480
  %610 = vmatprep.subr.bf16.mxu0 %v483
  %611 = vmatpush1.bf16.msra.mxu0 %v482
  %612 = vmatprep.subr.bf16.mxu0 %v485
  %613 = vmatpush1.bf16.msra.mxu0 %v484
  %614 = vmatprep.subr.bf16.mxu0 %v487
  %615 = vmatpush1.bf16.msra.mxu0 %v486
  %616 = vmatprep.subr.bf16.mxu0 %v489
  %617 = vmatpush1.bf16.msra.mxu0 %v488
  %618 = vmatprep.subr.bf16.mxu0 %v491
  %619 = vmatpush1.bf16.msra.mxu0 %v490
  %620 = vmatprep.subr.bf16.mxu0 %v493
  %621 = vmatpush1.bf16.msra.mxu0 %v492
  %622 = vmatprep.subr.bf16.mxu0 %v495
  %623 = vmatpush1.bf16.msra.mxu0 %v494
  %624 = vmatprep.subr.bf16.mxu0 %v497
  %625 = vmatpush1.bf16.msra.mxu0 %v496
  %626 = vmatprep.subr.bf16.mxu0 %v499
  %627 = vmatpush1.bf16.msra.mxu0 %v498
  %628 = vmatprep.subr.bf16.mxu0 %v501
  %629 = vmatpush1.bf16.msra.mxu0 %v500
  %630 = vmatprep.subr.bf16.mxu0 %v503
  %631 = vmatpush1.bf16.msra.mxu0 %v502
  %632 = vmatprep.subr.bf16.mxu0 %v505
  %633 = vmatpush1.bf16.msra.mxu0 %v504
  %634 = vmatprep.mubr.bf16.mxu0 %v203
  %635 = vmatmul.mubr.bf16.gmra.mrb[0].mxu0 %v202
  %v636 = vpop.f32.mrb[0].mxu0
  %v637 = vadd.f32 %v275, %v636
  %v638 = vpop.f32.mrb[0].mxu0
  %v639 = vadd.f32 %v279, %v638
  %v640 = vpop.f32.mrb[0].mxu0
  %v641 = vpop.f32.mrb[0].mxu0
  %642 = vdwg.mxu0
  %643 = vmatprep.subr.bf16.mxu0 %v507
  %644 = vmatpush1.bf16.msra.mxu0 %v506
  %645 = vmatprep.subr.bf16.mxu0 %v509
  %646 = vmatpush1.bf16.msra.mxu0 %v508
  %647 = vmatprep.subr.bf16.mxu0 %v511
  %648 = vmatpush1.bf16.msra.mxu0 %v510
  %649 = vmatprep.subr.bf16.mxu0 %v513
  %650 = vmatpush1.bf16.msra.mxu0 %v512
  %651 = vmatprep.subr.bf16.mxu0 %v515
  %652 = vmatpush1.bf16.msra.mxu0 %v514
  %653 = vmatprep.subr.bf16.mxu0 %v517
  %654 = vmatpush1.bf16.msra.mxu0 %v516
  %655 = vmatprep.subr.bf16.mxu0 %v519
  %656 = vmatpush1.bf16.msra.mxu0 %v518
  %657 = vmatprep.subr.bf16.mxu0 %v521
  %658 = vmatpush1.bf16.msra.mxu0 %v520
  %659 = vmatprep.subr.bf16.mxu0 %v523
  %660 = vmatpush1.bf16.msra.mxu0 %v522
  %661 = vmatprep.subr.bf16.mxu0 %v525
  %662 = vmatpush1.bf16.msra.mxu0 %v524
  %663 = vmatprep.subr.bf16.mxu0 %v527
  %664 = vmatpush1.bf16.msra.mxu0 %v526
  %665 = vmatprep.subr.bf16.mxu0 %v529
  %666 = vmatpush1.bf16.msra.mxu0 %v528
  %667 = vmatprep.subr.bf16.mxu0 %v531
  %668 = vmatpush1.bf16.msra.mxu0 %v530
  %669 = vmatprep.subr.bf16.mxu0 %v533
  %670 = vmatpush1.bf16.msra.mxu0 %v532
  %671 = vmatprep.subr.bf16.mxu0 %v535
  %672 = vmatpush1.bf16.msra.mxu0 %v534
  %673 = vmatprep.subr.bf16.mxu0 %v537
  %674 = vmatpush1.bf16.msra.mxu0 %v536
  %675 = vmatprep.mubr.bf16.mxu0 %v205
  %676 = vmatmul.mubr.bf16.gmra.mrb[0].mxu0 %v204
  %v677 = vpop.f32.mrb[0].mxu0
  %v678 = vadd.f32 %v637, %v677
  %v679 = vpop.f32.mrb[0].mxu0
  %v680 = vadd.f32 %v639, %v679
  %v681 = vpop.f32.mrb[0].mxu0
  %v682 = vpop.f32.mrb[0].mxu0
  %683 = vdwg.mxu0
  %v684 = vpack.c.bf16 %v678, %v678
  %v685 = vpack.c.bf16 %v680, %v680
  %v686 = vld [vmem:[%s5] sm:$0xff]
  %v687 = vld [vmem:[%s5 + $0x8] sm:$0xff]
  %v688 = vld [vmem:[%s5 + $0x10] sm:$0xff]
  %v689 = vld [vmem:[%s5 + $0x18] sm:$0xff]
  %v690 = vld [vmem:[%s5 + $0x20] sm:$0xff]
  %v691 = vld [vmem:[%s5 + $0x28] sm:$0xff]
  %v692 = vld [vmem:[%s5 + $0x30] sm:$0xff]
  %v693 = vld [vmem:[%s5 + $0x38] sm:$0xff]
  %v694 = vld [vmem:[%s5 + $0x40] sm:$0xff]
  %v695 = vld [vmem:[%s5 + $0x48] sm:$0xff]
  %v696 = vld [vmem:[%s5 + $0x50] sm:$0xff]
  %v697 = vld [vmem:[%s5 + $0x58] sm:$0xff]
  %v698 = vld [vmem:[%s5 + $0x60] sm:$0xff]
  %v699 = vld [vmem:[%s5 + $0x68] sm:$0xff]
  %v700 = vld [vmem:[%s5 + $0x70] sm:$0xff]
  %v701 = vld [vmem:[%s5 + $0x78] sm:$0xff]
  %v702 = vld [vmem:[%s5 + $0x80] sm:$0xff]
  %v703 = vld [vmem:[%s5 + $0x88] sm:$0xff]
  %v704 = vld [vmem:[%s5 + $0x90] sm:$0xff]
  %v705 = vld [vmem:[%s5 + $0x98] sm:$0xff]
  %v706 = vld [vmem:[%s5 + $0xa0] sm:$0xff]
  %v707 = vld [vmem:[%s5 + $0xa8] sm:$0xff]
  %v708 = vld [vmem:[%s5 + $0xb0] sm:$0xff]
  %v709 = vld [vmem:[%s5 + $0xb8] sm:$0xff]
  %v710 = vld [vmem:[%s5 + $0xc0] sm:$0xff]
  %v711 = vld [vmem:[%s5 + $0xc8] sm:$0xff]
  %v712 = vld [vmem:[%s5 + $0xd0] sm:$0xff]
  %v713 = vld [vmem:[%s5 + $0xd8] sm:$0xff]
  %v714 = vld [vmem:[%s5 + $0xe0] sm:$0xff]
  %v715 = vld [vmem:[%s5 + $0xe8] sm:$0xff]
  %v716 = vld [vmem:[%s5 + $0xf0] sm:$0xff]
  %v717 = vld [vmem:[%s5 + $0xf8] sm:$0xff]
  %v718 = vld [vmem:[%s5 + $0x100] sm:$0xff]
  %v719 = vld [vmem:[%s5 + $0x108] sm:$0xff]
  %v720 = vld [vmem:[%s5 + $0x110] sm:$0xff]
  %v721 = vld [vmem:[%s5 + $0x118] sm:$0xff]
  %v722 = vld [vmem:[%s5 + $0x120] sm:$0xff]
  %v723 = vld [vmem:[%s5 + $0x128] sm:$0xff]
  %v724 = vld [vmem:[%s5 + $0x130] sm:$0xff]
  %v725 = vld [vmem:[%s5 + $0x138] sm:$0xff]
  %v726 = vld [vmem:[%s5 + $0x140] sm:$0xff]
  %v727 = vld [vmem:[%s5 + $0x148] sm:$0xff]
  %v728 = vld [vmem:[%s5 + $0x150] sm:$0xff]
  %v729 = vld [vmem:[%s5 + $0x158] sm:$0xff]
  %v730 = vld [vmem:[%s5 + $0x160] sm:$0xff]
  %v731 = vld [vmem:[%s5 + $0x168] sm:$0xff]
  %v732 = vld [vmem:[%s5 + $0x170] sm:$0xff]
  %v733 = vld [vmem:[%s5 + $0x178] sm:$0xff]
  %v734 = vld [vmem:[%s5 + $0x180] sm:$0xff]
  %v735 = vld [vmem:[%s5 + $0x188] sm:$0xff]
  %v736 = vld [vmem:[%s5 + $0x190] sm:$0xff]
  %v737 = vld [vmem:[%s5 + $0x198] sm:$0xff]
  %v738 = vld [vmem:[%s5 + $0x1a0] sm:$0xff]
  %v739 = vld [vmem:[%s5 + $0x1a8] sm:$0xff]
  %v740 = vld [vmem:[%s5 + $0x1b0] sm:$0xff]
  %v741 = vld [vmem:[%s5 + $0x1b8] sm:$0xff]
  %v742 = vld [vmem:[%s5 + $0x1c0] sm:$0xff]
  %v743 = vld [vmem:[%s5 + $0x1c8] sm:$0xff]
  %v744 = vld [vmem:[%s5 + $0x1d0] sm:$0xff]
  %v745 = vld [vmem:[%s5 + $0x1d8] sm:$0xff]
  %v746 = vld [vmem:[%s5 + $0x1e0] sm:$0xff]
  %v747 = vld [vmem:[%s5 + $0x1e8] sm:$0xff]
  %v748 = vld [vmem:[%s5 + $0x1f0] sm:$0xff]
  %v749 = vld [vmem:[%s5 + $0x1f8] sm:$0xff]
  %v750 = vld [vmem:[%s6] sm:$0xf]
  %v752 = vlaneseq
  %v753 = vshrl.u32 %v752, 7
  %v754 = vsub.s32 0, %v753
  %v755 = vrot.slane %v750, %v754
  %v756 = vlaneseq
  %v757 = vshrl.u32 %v756, 7
  %v758 = vsub.s32 1, %v757
  %v759 = vrot.slane %v750, %v758
  %v760 = vlaneseq
  %v761 = vshrl.u32 %v760, 7
  %v762 = vsub.s32 2, %v761
  %v763 = vrot.slane %v750, %v762
  %v764 = vlaneseq
  %v765 = vshrl.u32 %v764, 7
  %v766 = vsub.s32 3, %v765
  %v767 = vrot.slane %v750, %v766
  %v836 = vunpack.c.l.b16 %v686
  %v837 = vunpack.c.h.b16 %v686
  %v838 = vunpack.c.l.b16 %v687
  %v839 = vunpack.c.h.b16 %v687
  %v840 = vunpack.c.l.b16 %v688
  %v841 = vunpack.c.h.b16 %v688
  %v842 = vunpack.c.l.b16 %v689
  %v843 = vunpack.c.h.b16 %v689
  %v844 = vunpack.c.l.b16 %v690
  %v845 = vunpack.c.h.b16 %v690
  %v846 = vunpack.c.l.b16 %v691
  %v847 = vunpack.c.h.b16 %v691
  %v848 = vunpack.c.l.b16 %v692
  %v849 = vunpack.c.h.b16 %v692
  %v850 = vunpack.c.l.b16 %v693
  %v851 = vunpack.c.h.b16 %v693
  %v852 = vunpack.c.l.b16 %v694
  %v853 = vunpack.c.h.b16 %v694
  %v854 = vunpack.c.l.b16 %v695
  %v855 = vunpack.c.h.b16 %v695
  %v856 = vunpack.c.l.b16 %v696
  %v857 = vunpack.c.h.b16 %v696
  %v858 = vunpack.c.l.b16 %v697
  %v859 = vunpack.c.h.b16 %v697
  %v860 = vunpack.c.l.b16 %v698
  %v861 = vunpack.c.h.b16 %v698
  %v862 = vunpack.c.l.b16 %v699
  %v863 = vunpack.c.h.b16 %v699
  %v864 = vunpack.c.l.b16 %v700
  %v865 = vunpack.c.h.b16 %v700
  %v866 = vunpack.c.l.b16 %v701
  %v867 = vunpack.c.h.b16 %v701
  %v868 = vunpack.c.l.b16 %v702
  %v869 = vunpack.c.h.b16 %v702
  %v870 = vunpack.c.l.b16 %v703
  %v871 = vunpack.c.h.b16 %v703
  %v872 = vunpack.c.l.b16 %v704
  %v873 = vunpack.c.h.b16 %v704
  %v874 = vunpack.c.l.b16 %v705
  %v875 = vunpack.c.h.b16 %v705
  %v876 = vunpack.c.l.b16 %v706
  %v877 = vunpack.c.h.b16 %v706
  %v878 = vunpack.c.l.b16 %v707
  %v879 = vunpack.c.h.b16 %v707
  %v880 = vunpack.c.l.b16 %v708
  %v881 = vunpack.c.h.b16 %v708
  %v882 = vunpack.c.l.b16 %v709
  %v883 = vunpack.c.h.b16 %v709
  %v884 = vunpack.c.l.b16 %v710
  %v885 = vunpack.c.h.b16 %v710
  %v886 = vunpack.c.l.b16 %v711
  %v887 = vunpack.c.h.b16 %v711
  %v888 = vunpack.c.l.b16 %v712
  %v889 = vunpack.c.h.b16 %v712
  %v890 = vunpack.c.l.b16 %v713
  %v891 = vunpack.c.h.b16 %v713
  %v892 = vunpack.c.l.b16 %v714
  %v893 = vunpack.c.h.b16 %v714
  %v894 = vunpack.c.l.b16 %v715
  %v895 = vunpack.c.h.b16 %v715
  %v896 = vunpack.c.l.b16 %v716
  %v897 = vunpack.c.h.b16 %v716
  %v898 = vunpack.c.l.b16 %v717
  %v899 = vunpack.c.h.b16 %v717
  %v900 = vunpack.c.l.b16 %v718
  %v901 = vunpack.c.h.b16 %v718
  %v902 = vunpack.c.l.b16 %v719
  %v903 = vunpack.c.h.b16 %v719
  %v904 = vunpack.c.l.b16 %v720
  %v905 = vunpack.c.h.b16 %v720
  %v906 = vunpack.c.l.b16 %v721
  %v907 = vunpack.c.h.b16 %v721
  %v908 = vunpack.c.l.b16 %v722
  %v909 = vunpack.c.h.b16 %v722
  %v910 = vunpack.c.l.b16 %v723
  %v911 = vunpack.c.h.b16 %v723
  %v912 = vunpack.c.l.b16 %v724
  %v913 = vunpack.c.h.b16 %v724
  %v914 = vunpack.c.l.b16 %v725
  %v915 = vunpack.c.h.b16 %v725
  %v916 = vunpack.c.l.b16 %v726
  %v917 = vunpack.c.h.b16 %v726
  %v918 = vunpack.c.l.b16 %v727
  %v919 = vunpack.c.h.b16 %v727
  %v920 = vunpack.c.l.b16 %v728
  %v921 = vunpack.c.h.b16 %v728
  %v922 = vunpack.c.l.b16 %v729
  %v923 = vunpack.c.h.b16 %v729
  %v924 = vunpack.c.l.b16 %v730
  %v925 = vunpack.c.h.b16 %v730
  %v926 = vunpack.c.l.b16 %v731
  %v927 = vunpack.c.h.b16 %v731
  %v928 = vunpack.c.l.b16 %v732
  %v929 = vunpack.c.h.b16 %v732
  %v930 = vunpack.c.l.b16 %v733
  %v931 = vunpack.c.h.b16 %v733
  %v932 = vunpack.c.l.b16 %v734
  %v933 = vunpack.c.h.b16 %v734
  %v934 = vunpack.c.l.b16 %v735
  %v935 = vunpack.c.h.b16 %v735
  %v936 = vunpack.c.l.b16 %v736
  %v937 = vunpack.c.h.b16 %v736
  %v938 = vunpack.c.l.b16 %v737
  %v939 = vunpack.c.h.b16 %v737
  %v940 = vunpack.c.l.b16 %v738
  %v941 = vunpack.c.h.b16 %v738
  %v942 = vunpack.c.l.b16 %v739
  %v943 = vunpack.c.h.b16 %v739
  %v944 = vunpack.c.l.b16 %v740
  %v945 = vunpack.c.h.b16 %v740
  %v946 = vunpack.c.l.b16 %v741
  %v947 = vunpack.c.h.b16 %v741
  %v948 = vunpack.c.l.b16 %v742
  %v949 = vunpack.c.h.b16 %v742
  %v950 = vunpack.c.l.b16 %v743
  %v951 = vunpack.c.h.b16 %v743
  %v952 = vunpack.c.l.b16 %v744
  %v953 = vunpack.c.h.b16 %v744
  %v954 = vunpack.c.l.b16 %v745
  %v955 = vunpack.c.h.b16 %v745
  %v956 = vunpack.c.l.b16 %v746
  %v957 = vunpack.c.h.b16 %v746
  %v958 = vunpack.c.l.b16 %v747
  %v959 = vunpack.c.h.b16 %v747
  %v960 = vunpack.c.l.b16 %v748
  %v961 = vunpack.c.h.b16 %v748
  %v962 = vunpack.c.l.b16 %v749
  %v963 = vunpack.c.h.b16 %v749
  %v964 = vpack.c.b16 %v840, %v836
  %v965 = vpack.c.b16 %v841, %v837
  %v966 = vpack.c.b16 %v842, %v838
  %v967 = vpack.c.b16 %v843, %v839
  %v968 = vpack.c.b16 %v848, %v844
  %v969 = vpack.c.b16 %v849, %v845
  %v970 = vpack.c.b16 %v850, %v846
  %v971 = vpack.c.b16 %v851, %v847
  %v972 = vpack.c.b16 %v856, %v852
  %v973 = vpack.c.b16 %v857, %v853
  %v974 = vpack.c.b16 %v858, %v854
  %v975 = vpack.c.b16 %v859, %v855
  %v976 = vpack.c.b16 %v864, %v860
  %v977 = vpack.c.b16 %v865, %v861
  %v978 = vpack.c.b16 %v866, %v862
  %v979 = vpack.c.b16 %v867, %v863
  %v980 = vpack.c.b16 %v872, %v868
  %v981 = vpack.c.b16 %v873, %v869
  %v982 = vpack.c.b16 %v874, %v870
  %v983 = vpack.c.b16 %v875, %v871
  %v984 = vpack.c.b16 %v880, %v876
  %v985 = vpack.c.b16 %v881, %v877
  %v986 = vpack.c.b16 %v882, %v878
  %v987 = vpack.c.b16 %v883, %v879
  %v988 = vpack.c.b16 %v888, %v884
  %v989 = vpack.c.b16 %v889, %v885
  %v990 = vpack.c.b16 %v890, %v886
  %v991 = vpack.c.b16 %v891, %v887
  %v992 = vpack.c.b16 %v896, %v892
  %v993 = vpack.c.b16 %v897, %v893
  %v994 = vpack.c.b16 %v898, %v894
  %v995 = vpack.c.b16 %v899, %v895
  %v996 = vpack.c.b16 %v904, %v900
  %v997 = vpack.c.b16 %v905, %v901
  %v998 = vpack.c.b16 %v906, %v902
  %v999 = vpack.c.b16 %v907, %v903
  %v1000 = vpack.c.b16 %v912, %v908
  %v1001 = vpack.c.b16 %v913, %v909
  %v1002 = vpack.c.b16 %v914, %v910
  %v1003 = vpack.c.b16 %v915, %v911
  %v1004 = vpack.c.b16 %v920, %v916
  %v1005 = vpack.c.b16 %v921, %v917
  %v1006 = vpack.c.b16 %v922, %v918
  %v1007 = vpack.c.b16 %v923, %v919
  %v1008 = vpack.c.b16 %v928, %v924
  %v1009 = vpack.c.b16 %v929, %v925
  %v1010 = vpack.c.b16 %v930, %v926
  %v1011 = vpack.c.b16 %v931, %v927
  %v1012 = vpack.c.b16 %v936, %v932
  %v1013 = vpack.c.b16 %v937, %v933
  %v1014 = vpack.c.b16 %v938, %v934
  %v1015 = vpack.c.b16 %v939, %v935
  %v1016 = vpack.c.b16 %v944, %v940
  %v1017 = vpack.c.b16 %v945, %v941
  %v1018 = vpack.c.b16 %v946, %v942
  %v1019 = vpack.c.b16 %v947, %v943
  %v1020 = vpack.c.b16 %v952, %v948
  %v1021 = vpack.c.b16 %v953, %v949
  %v1022 = vpack.c.b16 %v954, %v950
  %v1023 = vpack.c.b16 %v955, %v951
  %v1024 = vpack.c.b16 %v960, %v956
  %v1025 = vpack.c.b16 %v961, %v957
  %v1026 = vpack.c.b16 %v962, %v958
  %v1027 = vpack.c.b16 %v963, %v959
  %1092 = vmatprep.subr.bf16.mxu0 %v965
  %1093 = vmatpush1.bf16.msra.mxu0 %v964
  %1094 = vmatprep.subr.bf16.mxu0 %v969
  %1095 = vmatpush1.bf16.msra.mxu0 %v968
  %1096 = vmatprep.subr.bf16.mxu0 %v973
  %1097 = vmatpush1.bf16.msra.mxu0 %v972
  %1098 = vmatprep.subr.bf16.mxu0 %v977
  %1099 = vmatpush1.bf16.msra.mxu0 %v976
  %1100 = vmatprep.subr.bf16.mxu0 %v981
  %1101 = vmatpush1.bf16.msra.mxu0 %v980
  %1102 = vmatprep.subr.bf16.mxu0 %v985
  %1103 = vmatpush1.bf16.msra.mxu0 %v984
  %1104 = vmatprep.subr.bf16.mxu0 %v989
  %1105 = vmatpush1.bf16.msra.mxu0 %v988
  %1106 = vmatprep.subr.bf16.mxu0 %v993
  %1107 = vmatpush1.bf16.msra.mxu0 %v992
  %1108 = vmatprep.subr.bf16.mxu0 %v997
  %1109 = vmatpush1.bf16.msra.mxu0 %v996
  %1110 = vmatprep.subr.bf16.mxu0 %v1001
  %1111 = vmatpush1.bf16.msra.mxu0 %v1000
  %1112 = vmatprep.subr.bf16.mxu0 %v1005
  %1113 = vmatpush1.bf16.msra.mxu0 %v1004
  %1114 = vmatprep.subr.bf16.mxu0 %v1009
  %1115 = vmatpush1.bf16.msra.mxu0 %v1008
  %1116 = vmatprep.subr.bf16.mxu0 %v1013
  %1117 = vmatpush1.bf16.msra.mxu0 %v1012
  %1118 = vmatprep.subr.bf16.mxu0 %v1017
  %1119 = vmatpush1.bf16.msra.mxu0 %v1016
  %1120 = vmatprep.subr.bf16.mxu0 %v1021
  %1121 = vmatpush1.bf16.msra.mxu0 %v1020
  %1122 = vmatprep.subr.bf16.mxu0 %v1025
  %1123 = vmatpush1.bf16.msra.mxu0 %v1024
  %1124 = vmatprep.mubr.bf16.mxu0 %v685
  %1125 = vmatmul.mubr.bf16.gmra.mrb[0].mxu0 %v684
  %v1126 = vpop.f32.mrb[0].mxu0
  %v1127 = vadd.f32 %v755, %v1126
  %v1128 = vpop.f32.mrb[0].mxu0
  %v1129 = vadd.f32 %v759, %v1128
  %v1130 = vpop.f32.mrb[0].mxu0
  %v1131 = vpop.f32.mrb[0].mxu0
  %1132 = vdwg.mxu0
  %1133 = vmatprep.subr.bf16.mxu0 %v967
  %1134 = vmatpush1.bf16.msra.mxu0 %v966
  %1135 = vmatprep.subr.bf16.mxu0 %v971
  %1136 = vmatpush1.bf16.msra.mxu0 %v970
  %1137 = vmatprep.subr.bf16.mxu0 %v975
  %1138 = vmatpush1.bf16.msra.mxu0 %v974
  %1139 = vmatprep.subr.bf16.mxu0 %v979
  %1140 = vmatpush1.bf16.msra.mxu0 %v978
  %1141 = vmatprep.subr.bf16.mxu0 %v983
  %1142 = vmatpush1.bf16.msra.mxu0 %v982
  %1143 = vmatprep.subr.bf16.mxu0 %v987
  %1144 = vmatpush1.bf16.msra.mxu0 %v986
  %1145 = vmatprep.subr.bf16.mxu0 %v991
  %1146 = vmatpush1.bf16.msra.mxu0 %v990
  %1147 = vmatprep.subr.bf16.mxu0 %v995
  %1148 = vmatpush1.bf16.msra.mxu0 %v994
  %1149 = vmatprep.subr.bf16.mxu0 %v999
  %1150 = vmatpush1.bf16.msra.mxu0 %v998
  %1151 = vmatprep.subr.bf16.mxu0 %v1003
  %1152 = vmatpush1.bf16.msra.mxu0 %v1002
  %1153 = vmatprep.subr.bf16.mxu0 %v1007
  %1154 = vmatpush1.bf16.msra.mxu0 %v1006
  %1155 = vmatprep.subr.bf16.mxu0 %v1011
  %1156 = vmatpush1.bf16.msra.mxu0 %v1010
  %1157 = vmatprep.subr.bf16.mxu0 %v1015
  %1158 = vmatpush1.bf16.msra.mxu0 %v1014
  %1159 = vmatprep.subr.bf16.mxu0 %v1019
  %1160 = vmatpush1.bf16.msra.mxu0 %v1018
  %1161 = vmatprep.subr.bf16.mxu0 %v1023
  %1162 = vmatpush1.bf16.msra.mxu0 %v1022
  %1163 = vmatprep.subr.bf16.mxu0 %v1027
  %1164 = vmatpush1.bf16.msra.mxu0 %v1026
  %1165 = vmatprep.mubr.bf16.mxu0 %v685
  %1166 = vmatmul.mubr.bf16.gmra.mrb[0].mxu0 %v684
  %v1167 = vpop.f32.mrb[0].mxu0
  %v1168 = vadd.f32 %v763, %v1167
  %v1169 = vpop.f32.mrb[0].mxu0
  %v1170 = vadd.f32 %v767, %v1169
  %v1171 = vpop.f32.mrb[0].mxu0
  %v1172 = vpop.f32.mrb[0].mxu0
  %1173 = vdwg.mxu0
  %v1174 = vmax.f32 %v1127, 0.0
  %v1175 = vmax.f32 %v1129, 0.0
  %v1176 = vmax.f32 %v1168, 0.0
  %v1177 = vmax.f32 %v1170, 0.0
  %v1178 = vpack.c.bf16 %v1175, %v1175
  %v1179 = vpack.c.bf16 %v1176, %v1176
  %v1180 = vpack.c.bf16 %v1177, %v1177
  %v1181 = vld [vmem:[%s7] sm:$0x1]
  %v1183 = vlaneseq
  %v1184 = vshrl.u32 %v1183, 7
  %v1185 = vsub.s32 0, %v1184
  %v1186 = vrot.slane %v1181, %v1185
  %v1188 = vmul.f32 %v1174, %v1186
  %1189 = vadd.xlane.f32.xlu0 %v1188
  %v1190 = vpop.xlane.xlu0 %1189
  %v1191 = vld [vmem:[#allocation2] sm:$0x1]
  %v1193 = vlaneseq
  %v1194 = vshrl.u32 %v1193, 7
  %v1195 = vsub.s32 0, %v1194
  %v1196 = vrot.slane %v1191, %v1195
  %v1198 = vadd.f32 %v1190, %v1196
  %v1199 = vld [vmem:[%s9] sm:$0xf]
  %v1200 = vld [vmem:[%s9 + $0x4] sm:$0xf]
  %v1201 = vld [vmem:[%s9 + $0x8] sm:$0xf]
  %v1202 = vld [vmem:[%s9 + $0xc] sm:$0xf]
  %v1203 = vld [vmem:[%s9 + $0x10] sm:$0xf]
  %v1204 = vld [vmem:[%s9 + $0x14] sm:$0xf]
  %v1205 = vld [vmem:[%s9 + $0x18] sm:$0xf]
  %v1206 = vld [vmem:[%s9 + $0x1c] sm:$0xf]
  %v1207 = vld [vmem:[%s9 + $0x20] sm:$0xf]
  %v1208 = vld [vmem:[%s9 + $0x24] sm:$0xf]
  %v1209 = vld [vmem:[%s9 + $0x28] sm:$0xf]
  %v1210 = vld [vmem:[%s9 + $0x2c] sm:$0xf]
  %v1211 = vld [vmem:[%s9 + $0x30] sm:$0xf]
  %v1212 = vld [vmem:[%s9 + $0x34] sm:$0xf]
  %v1213 = vld [vmem:[%s9 + $0x38] sm:$0xf]
  %v1214 = vld [vmem:[%s9 + $0x3c] sm:$0xf]
  %v1215 = vld [vmem:[%s9 + $0x40] sm:$0xf]
  %v1216 = vld [vmem:[%s9 + $0x44] sm:$0xf]
  %v1217 = vld [vmem:[%s9 + $0x48] sm:$0xf]
  %v1218 = vld [vmem:[%s9 + $0x4c] sm:$0xf]
  %v1219 = vld [vmem:[%s9 + $0x50] sm:$0xf]
  %v1220 = vld [vmem:[%s9 + $0x54] sm:$0xf]
  %v1221 = vld [vmem:[%s9 + $0x58] sm:$0xf]
  %v1222 = vld [vmem:[%s9 + $0x5c] sm:$0xf]
  %v1223 = vld [vmem:[%s9 + $0x60] sm:$0xf]
  %v1224 = vld [vmem:[%s9 + $0x64] sm:$0xf]
  %v1225 = vld [vmem:[%s9 + $0x68] sm:$0xf]
  %v1226 = vld [vmem:[%s9 + $0x6c] sm:$0xf]
  %v1227 = vld [vmem:[%s9 + $0x70] sm:$0xf]
  %v1228 = vld [vmem:[%s9 + $0x74] sm:$0xf]
  %v1229 = vld [vmem:[%s9 + $0x78] sm:$0xf]
  %v1230 = vld [vmem:[%s9 + $0x7c] sm:$0xf]
  %v1231 = vld [vmem:[%s9 + $0x80] sm:$0xf]
  %v1232 = vld [vmem:[%s9 + $0x84] sm:$0xf]
  %v1233 = vld [vmem:[%s9 + $0x88] sm:$0xf]
  %v1234 = vld [vmem:[%s9 + $0x8c] sm:$0xf]
  %v1235 = vld [vmem:[%s9 + $0x90] sm:$0xf]
  %v1236 = vld [vmem:[%s9 + $0x94] sm:$0xf]
  %v1237 = vld [vmem:[%s9 + $0x98] sm:$0xf]
  %v1238 = vld [vmem:[%s9 + $0x9c] sm:$0xf]
  %v1239 = vld [vmem:[%s9 + $0xa0] sm:$0xf]
  %v1240 = vld [vmem:[%s9 + $0xa4] sm:$0xf]
  %v1241 = vld [vmem:[%s9 + $0xa8] sm:$0xf]
  %v1242 = vld [vmem:[%s9 + $0xac] sm:$0xf]
  %v1243 = vld [vmem:[%s9 + $0xb0] sm:$0xf]
  %v1244 = vld [vmem:[%s9 + $0xb4] sm:$0xf]
  %v1245 = vld [vmem:[%s9 + $0xb8] sm:$0xf]
  %v1246 = vld [vmem:[%s9 + $0xbc] sm:$0xf]
  %v1247 = vld [vmem:[%s10] sm:$0x1]
  %v1249 = vlaneseq
  %v1250 = vshrl.u32 %v1249, 7
  %v1251 = vsub.s32 0, %v1250
  %v1252 = vrot.slane %v1247, %v1251
  %v1302 = vunpack.c.l.b16 %v1199
  %v1303 = vunpack.c.l.b16 %v1200
  %v1304 = vunpack.c.l.b16 %v1201
  %v1305 = vunpack.c.l.b16 %v1202
  %v1306 = vunpack.c.l.b16 %v1203
  %v1307 = vunpack.c.l.b16 %v1204
  %v1308 = vunpack.c.l.b16 %v1205
  %v1309 = vunpack.c.l.b16 %v1206
  %v1310 = vunpack.c.l.b16 %v1207
  %v1311 = vunpack.c.l.b16 %v1208
  %v1312 = vunpack.c.l.b16 %v1209
  %v1313 = vunpack.c.l.b16 %v1210
  %v1314 = vunpack.c.l.b16 %v1211
  %v1315 = vunpack.c.l.b16 %v1212
  %v1316 = vunpack.c.l.b16 %v1213
  %v1317 = vunpack.c.l.b16 %v1214
  %v1318 = vunpack.c.l.b16 %v1215
  %v1319 = vunpack.c.l.b16 %v1216
  %v1320 = vunpack.c.l.b16 %v1217
  %v1321 = vunpack.c.l.b16 %v1218
  %v1322 = vunpack.c.l.b16 %v1219
  %v1323 = vunpack.c.l.b16 %v1220
  %v1324 = vunpack.c.l.b16 %v1221
  %v1325 = vunpack.c.l.b16 %v1222
  %v1326 = vunpack.c.l.b16 %v1223
  %v1327 = vunpack.c.l.b16 %v1224
  %v1328 = vunpack.c.l.b16 %v1225
  %v1329 = vunpack.c.l.b16 %v1226
  %v1330 = vunpack.c.l.b16 %v1227
  %v1331 = vunpack.c.l.b16 %v1228
  %v1332 = vunpack.c.l.b16 %v1229
  %v1333 = vunpack.c.l.b16 %v1230
  %v1334 = vunpack.c.l.b16 %v1231
  %v1335 = vunpack.c.l.b16 %v1232
  %v1336 = vunpack.c.l.b16 %v1233
  %v1337 = vunpack.c.l.b16 %v1234
  %v1338 = vunpack.c.l.b16 %v1235
  %v1339 = vunpack.c.l.b16 %v1236
  %v1340 = vunpack.c.l.b16 %v1237
  %v1341 = vunpack.c.l.b16 %v1238
  %v1342 = vunpack.c.l.b16 %v1239
  %v1343 = vunpack.c.l.b16 %v1240
  %v1344 = vunpack.c.l.b16 %v1241
  %v1345 = vunpack.c.l.b16 %v1242
  %v1346 = vunpack.c.l.b16 %v1243
  %v1347 = vunpack.c.l.b16 %v1244
  %v1348 = vunpack.c.l.b16 %v1245
  %v1349 = vunpack.c.l.b16 %v1246
  %v1350 = vpack.c.b16 %v1303, %v1302
  %v1351 = vpack.c.b16 %v1305, %v1304
  %v1352 = vpack.c.b16 %v1307, %v1306
  %v1353 = vpack.c.b16 %v1309, %v1308
  %v1354 = vpack.c.b16 %v1311, %v1310
  %v1355 = vpack.c.b16 %v1313, %v1312
  %v1356 = vpack.c.b16 %v1315, %v1314
  %v1357 = vpack.c.b16 %v1317, %v1316
  %v1358 = vpack.c.b16 %v1319, %v1318
  %v1359 = vpack.c.b16 %v1321, %v1320
  %v1360 = vpack.c.b16 %v1323, %v1322
  %v1361 = vpack.c.b16 %v1325, %v1324
  %v1362 = vpack.c.b16 %v1327, %v1326
  %v1363 = vpack.c.b16 %v1329, %v1328
  %v1364 = vpack.c.b16 %v1331, %v1330
  %v1365 = vpack.c.b16 %v1333, %v1332
  %v1366 = vpack.c.b16 %v1335, %v1334
  %v1367 = vpack.c.b16 %v1337, %v1336
  %v1368 = vpack.c.b16 %v1339, %v1338
  %v1369 = vpack.c.b16 %v1341, %v1340
  %v1370 = vpack.c.b16 %v1343, %v1342
  %v1371 = vpack.c.b16 %v1345, %v1344
  %v1372 = vpack.c.b16 %v1347, %v1346
  %v1373 = vpack.c.b16 %v1349, %v1348
  %1398 = vmatprep.subr.bf16.mxu0 0
  %1399 = vmatpush1.bf16.msra.mxu0 %v1350
  %1400 = vmatprep.subr.bf16.mxu0 0
  %1401 = vmatpush1.bf16.msra.mxu0 %v1351
  %1402 = vmatprep.subr.bf16.mxu0 0
  %1403 = vmatpush1.bf16.msra.mxu0 %v1352
  %1404 = vmatprep.subr.bf16.mxu0 0
  %1405 = vmatpush1.bf16.msra.mxu0 %v1353
  %1406 = vmatprep.subr.bf16.mxu0 0
  %1407 = vmatpush1.bf16.msra.mxu0 %v1354
  %1408 = vmatprep.subr.bf16.mxu0 0
  %1409 = vmatpush1.bf16.msra.mxu0 %v1355
  %1410 = vmatprep.subr.bf16.mxu0 0
  %1411 = vmatpush1.bf16.msra.mxu0 %v1356
  %1412 = vmatprep.subr.bf16.mxu0 0
  %1413 = vmatpush1.bf16.msra.mxu0 %v1357
  %1414 = vmatprep.subr.bf16.mxu0 0
  %1415 = vmatpush1.bf16.msra.mxu0 %v1358
  %1416 = vmatprep.subr.bf16.mxu0 0
  %1417 = vmatpush1.bf16.msra.mxu0 %v1359
  %1418 = vmatprep.subr.bf16.mxu0 0
  %1419 = vmatpush1.bf16.msra.mxu0 %v1360
  %1420 = vmatprep.subr.bf16.mxu0 0
  %1421 = vmatpush1.bf16.msra.mxu0 %v1361
  %1422 = vmatprep.subr.bf16.mxu0 0
  %1423 = vmatpush1.bf16.msra.mxu0 %v1362
  %1424 = vmatprep.subr.bf16.mxu0 0
  %1425 = vmatpush1.bf16.msra.mxu0 %v1363
  %1426 = vmatprep.subr.bf16.mxu0 0
  %1427 = vmatpush1.bf16.msra.mxu0 %v1364
  %1428 = vmatprep.subr.bf16.mxu0 0
  %1429 = vmatpush1.bf16.msra.mxu0 %v1365
  %1430 = vmatprep.mubr.bf16.mxu0 %v1179
  %1431 = vmatmul.mubr.bf16.gmra.mrb[0].mxu0 %v1178
  %v1432 = vpop.f32.mrb[0].mxu0
  %v1433 = vadd.f32 %v1252, %v1432
  %v1434 = vpop.f32.mrb[0].mxu0
  %v1435 = vpop.f32.mrb[0].mxu0
  %v1436 = vpop.f32.mrb[0].mxu0
  %1437 = vdwg.mxu0
  %1438 = vmatprep.subr.bf16.mxu0 0
  %1439 = vmatpush1.bf16.msra.mxu0 %v1366
  %1440 = vmatprep.subr.bf16.mxu0 0
  %1441 = vmatpush1.bf16.msra.mxu0 %v1367
  %1442 = vmatprep.subr.bf16.mxu0 0
  %1443 = vmatpush1.bf16.msra.mxu0 %v1368
  %1444 = vmatprep.subr.bf16.mxu0 0
  %1445 = vmatpush1.bf16.msra.mxu0 %v1369
  %1446 = vmatprep.subr.bf16.mxu0 0
  %1447 = vmatpush1.bf16.msra.mxu0 %v1370
  %1448 = vmatprep.subr.bf16.mxu0 0
  %1449 = vmatpush1.bf16.msra.mxu0 %v1371
  %1450 = vmatprep.subr.bf16.mxu0 0
  %1451 = vmatpush1.bf16.msra.mxu0 %v1372
  %1452 = vmatprep.subr.bf16.mxu0 0
  %1453 = vmatpush1.bf16.msra.mxu0 %v1373
  %1454 = vmatprep.subr.bf16.mxu0 0
  %1455 = vmatpush1.bf16.msra.mxu0 0
  %1456 = vmatprep.subr.bf16.mxu0 0
  %1457 = vmatpush1.bf16.msra.mxu0 0
  %1458 = vmatprep.subr.bf16.mxu0 0
  %1459 = vmatpush1.bf16.msra.mxu0 0
  %1460 = vmatprep.subr.bf16.mxu0 0
  %1461 = vmatpush1.bf16.msra.mxu0 0
  %1462 = vmatprep.subr.bf16.mxu0 0
  %1463 = vmatpush1.bf16.msra.mxu0 0
  %1464 = vmatprep.subr.bf16.mxu0 0
  %1465 = vmatpush1.bf16.msra.mxu0 0
  %1466 = vmatprep.subr.bf16.mxu0 0
  %1467 = vmatpush1.bf16.msra.mxu0 0
  %1468 = vmatprep.subr.bf16.mxu0 0
  %1469 = vmatpush1.bf16.msra.mxu0 0
  %1470 = vmatprep.mubr.bf16.mxu0 0
  %1471 = vmatmul.mubr.bf16.gmra.mrb[0].mxu0 %v1180
  %v1472 = vpop.f32.mrb[0].mxu0
  %v1473 = vadd.f32 %v1433, %v1472
  %v1474 = vpop.f32.mrb[0].mxu0
  %v1475 = vpop.f32.mrb[0].mxu0
  %v1476 = vpop.f32.mrb[0].mxu0
  %1477 = vdwg.mxu0
  %1479 = vset.pattern.permute.xlu0 0
  %1480 = vperm.xlu0 %1479, %v1198
  %v1481 = vpop.permute.xlu0 %1480
  %v1483 = vadd.f32 %v1473, %v1481
  %1484 = vst [vmem:[%s11] sm:$0xff] %v1483
  // Predicated region
  $region46: #{neural_forward.1} parent=0 // pred_check
    _
  $region47: #{neural_forward.1} parent=0 // pred_check_branch
    %1486 = sbr.rel (0) target = $region49
  $region48: #{neural_forward.1} parent=0 // pred_region
    _
  $region49: #{neural_forward.1} parent=0 // pred_fallthru
    _
  // Predicated region
  $region50: #{neural_forward.1} parent=0 // pred_check
    _
  $region51: #{neural_forward.1} parent=0 // pred_check_branch
    %1488 = sbr.rel (0) target = $region53
  $region52: #{neural_forward.1} parent=0 // pred_region
    _
  $region53: #{neural_forward.1} parent=0 // pred_fallthru
    _

</llo_original>
